<compile_context>
chip_gen: v6e
topology: v6e:2x2x1
jax: 0.10.0
libtpu: 0.0.40
codegen_flags: <defaults>
</compile_context>

<pallas_src>
import jax
import jax.numpy as jnp
from jax.experimental import pallas as pl
from jax.experimental.pallas import tpu as pltpu


# ---------------------------------------------------------------------------
# Tiling configuration
# ---------------------------------------------------------------------------
_LANE = 128                 # lane granularity
_T_CAP = 65536              # ceiling on pixels per grid step (lane tile)
_DATA_BUDGET = 24 << 20     # double-buffered streamed bytes per grid step
_TARGET_STEP = 2 << 20      # streamed bytes/step needed to hide ~0.35us overhead
_VMEM_LIMIT = 48 << 20      # scoped-VMEM request (safe on v7x's 64 MiB / TC)
_NB_CAP = 16                # max images per grid step (static unroll bound)


def _pick_blocks(n, hw, per_px_bytes):
    """Choose (nb, t): images per grid step and pixels per grid step.

    per_px_bytes = streamed bytes per pixel per image (inputs + outputs).
    """
    t_max = max(_LANE, (_DATA_BUDGET // (2 * per_px_bytes)) // _LANE * _LANE)
    t_max = min(t_max, _T_CAP)
    if hw <= t_max:
        # Whole pixel axis in one block.  block dim == full array dim is always
        # legal (even when hw is not a multiple of 128), so no padding needed.
        t = hw
        nb = min(n, _NB_CAP,
                 max(1, _DATA_BUDGET // (2 * per_px_bytes * t)),
                 max(1, pl.cdiv(_TARGET_STEP, per_px_bytes * t)))
        # Keep >= 2 (>= 4 when possible) grid steps for megacore / v7x 2 TCs.
        min_steps = max(1, min(n, 4))
        nb = max(1, min(nb, n // min_steps))
    else:
        t = t_max            # multiple of 128; last pixel block partial (masked)
        nb = 1
    return nb, t


# ---------------------------------------------------------------------------
# Kernels
# ---------------------------------------------------------------------------
def _fused_kernel(x_ref, h_ref, wx_ref, wh_ref, sx_ref, sh_ref,
                  ox_ref, oh_ref):
    # x_ref : (nb, Cin_x, T)  pixel tile (lane axis = pixels)
    # wx_ref: (Cout, Cin_x)   BN-scale-folded 1x1 conv weight (f32)
    # sx_ref: (Cout, 1)       folded BN shift (f32)
    # ox_ref: (nb, Cout, T)   lane-dense output tile
    wx = wx_ref[...]
    wh = wh_ref[...]
    sx = sx_ref[...]
    sh = sh_ref[...]
    for b in range(x_ref.shape[0]):           # short static unroll over batch
        x = jnp.maximum(x_ref[b].astype(jnp.float32), 0.0)        # ReLU (VPU)
        ox_ref[b] = (jnp.dot(wx, x,                               # conv (MXU)
                             preferred_element_type=jnp.float32)
                     + sx).astype(ox_ref.dtype)                   # BN shift
        h = jnp.maximum(h_ref[b].astype(jnp.float32), 0.0)
        oh_ref[b] = (jnp.dot(wh, h,
                             preferred_element_type=jnp.float32)
                     + sh).astype(oh_ref.dtype)


def _branch_kernel(x_ref, w_ref, s_ref, o_ref):
    w = w_ref[...]
    s = s_ref[...]
    for b in range(x_ref.shape[0]):
        x = jnp.maximum(x_ref[b].astype(jnp.float32), 0.0)
        o_ref[b] = (jnp.dot(w, x, preferred_element_type=jnp.float32)
                    + s).astype(o_ref.dtype)


# ---------------------------------------------------------------------------
# Wrappers
# ---------------------------------------------------------------------------
def _run_fused(x3, h3, wx, wh, sx, sh):
    """x3: (N, Cin_x, HW), h3: (N, Cin_h, HW) -> two (N, Cout, HW)."""
    n, cin_x, hw = x3.shape
    _, cin_h, _ = h3.shape
    cout = wx.shape[0]
    in_bytes = x3.dtype.itemsize
    out_dtype_x, out_dtype_h = x3.dtype, h3.dtype
    out_bytes = out_dtype_x.itemsize

    per_px = (cin_x + cin_h) * in_bytes + 2 * cout * out_bytes
    nb, t = _pick_blocks(n, hw, per_px)
    grid = (pl.cdiv(n, nb), pl.cdiv(hw, t))

    flops = 2 * n * hw * cout * (cin_x + cin_h)
    bytes_accessed = (n * hw * (cin_x + cin_h) * in_bytes
                      + n * hw * 2 * cout * out_bytes
                      + 4 * cout * (cin_x + cin_h + 2))

    out_x, out_h = pl.pallas_call(
        _fused_kernel,
        out_shape=(jax.ShapeDtypeStruct((n, cout, hw), out_dtype_x),
                   jax.ShapeDtypeStruct((n, cout, hw), out_dtype_h)),
        grid_spec=pltpu.PrefetchScalarGridSpec(
            num_scalar_prefetch=0,
            grid=grid,
            in_specs=[
                pl.BlockSpec((nb, cin_x, t), lambda b, p: (b, 0, p)),
                pl.BlockSpec((nb, cin_h, t), lambda b, p: (b, 0, p)),
                pl.BlockSpec((cout, cin_x), lambda b, p: (0, 0)),
                pl.BlockSpec((cout, cin_h), lambda b, p: (0, 0)),
                pl.BlockSpec((cout, 1), lambda b, p: (0, 0)),
                pl.BlockSpec((cout, 1), lambda b, p: (0, 0)),
            ],
            out_specs=[
                pl.BlockSpec((nb, cout, t), lambda b, p: (b, 0, p)),
                pl.BlockSpec((nb, cout, t), lambda b, p: (b, 0, p)),
            ]),
        compiler_params=pltpu.CompilerParams(
            dimension_semantics=("parallel", "parallel"),
            vmem_limit_bytes=_VMEM_LIMIT),
        cost_estimate=pl.CostEstimate(flops=flops, transcendentals=0,
                                      bytes_accessed=bytes_accessed),
    )(x3, h3, wx, wh, sx, sh)
    return out_x, out_h


def _run_branch(x3, w, s):
    """Fallback for mismatched x/h spatial shapes: one branch per call."""
    n, cin, hw = x3.shape
    cout = w.shape[0]
    in_bytes = x3.dtype.itemsize
    out_dtype = x3.dtype
    out_bytes = out_dtype.itemsize

    per_px = cin * in_bytes + cout * out_bytes
    nb, t = _pick_blocks(n, hw, per_px)
    grid = (pl.cdiv(n, nb), pl.cdiv(hw, t))

    out = pl.pallas_call(
        _branch_kernel,
        out_shape=jax.ShapeDtypeStruct((n, cout, hw), out_dtype),
        grid_spec=pltpu.PrefetchScalarGridSpec(
            num_scalar_prefetch=0,
            grid=grid,
            in_specs=[
                pl.BlockSpec((nb, cin, t), lambda b, p: (b, 0, p)),
                pl.BlockSpec((cout, cin), lambda b, p: (0, 0)),
                pl.BlockSpec((cout, 1), lambda b, p: (0, 0)),
            ],
            out_specs=pl.BlockSpec((nb, cout, t), lambda b, p: (b, 0, p))),
        compiler_params=pltpu.CompilerParams(
            dimension_semantics=("parallel", "parallel"),
            vmem_limit_bytes=_VMEM_LIMIT),
        cost_estimate=pl.CostEstimate(
            flops=2 * n * hw * cout * cin, transcendentals=0,
            bytes_accessed=(n * hw * cin * in_bytes
                            + n * hw * cout * out_bytes
                            + 4 * cout * (cin + 1))),
    )(x3, w, s)
    return out


# ---------------------------------------------------------------------------
# Module
# ---------------------------------------------------------------------------
class ResizeCell1Pallas:
    """JAX/Pallas re-implementation of NASNet ResizeCell1 (forward, eval BN)."""

    def __init__(self, in_channels_x, in_channels_h, out_channels, key):
        k1, k2, k3, k4, k5, k6 = jax.random.split(key, 6)
        # Conv2d(Cin, Cout, 1, bias=False): torch weight (Cout, Cin, 1, 1).
        # Stored as (Cout, Cin) so pixels sit on the lane axis in the matmul.
        self.w_left = jax.random.normal(
            k1, (out_channels, in_channels_x), jnp.float32) * 0.1
        self.w_right = jax.random.normal(
            k2, (out_channels, in_channels_h), jnp.float32) * 0.1
        # BatchNorm2d(eps=1e-3, affine=True); running stats init mean=0, var=1.
        self.gamma_left = 1.0 + 0.05 * jax.random.normal(k3, (out_channels,))
        self.beta_left = 0.05 * jax.random.normal(k4, (out_channels,))
        self.gamma_right = 1.0 + 0.05 * jax.random.normal(k5, (out_channels,))
        self.beta_right = 0.05 * jax.random.normal(k6, (out_channels,))
        self.mean_left = jnp.zeros((out_channels,), jnp.float32)
        self.var_left = jnp.ones((out_channels,), jnp.float32)
        self.mean_right = jnp.zeros((out_channels,), jnp.float32)
        self.var_right = jnp.ones((out_channels,), jnp.float32)
        self.eps = 1e-3
        self.out_channels = out_channels
        self._fold_params()

    def _fold_params(self):
        """Fold BN scale into the conv weight ONCE at parameter-build time."""
        def fold(w, gamma, beta, mean, var):
            scale = gamma / jnp.sqrt(var + self.eps)
            w_fold = w * scale[:, None]                    # (Cout, Cin)
            shift = (beta - mean * scale)[:, None]         # (Cout, 1)
            return w_fold, shift
        self.wf_left, self.shift_left = fold(
            self.w_left, self.gamma_left, self.beta_left,
            self.mean_left, self.var_left)
        self.wf_right, self.shift_right = fold(
            self.w_right, self.gamma_right, self.beta_right,
            self.mean_right, self.var_right)

    def __call__(self, x_nchw, h_nchw):
        # TODO(synk): training-mode BN (batch statistics + running-stat update)
        # is not implemented; eval-mode BN with running stats is used.
        n, cx, hh, ww = x_nchw.shape
        nh, ch, hh2, ww2 = h_nchw.shape
        x3 = x_nchw.reshape(n, cx, hh * ww)        # free reshape, no transpose
        h3 = h_nchw.reshape(nh, ch, hh2 * ww2)
        if (n, hh, ww) == (nh, hh2, ww2):
            ox3, oh3 = _run_fused(x3, h3, self.wf_left, self.wf_right,
                                  self.shift_left, self.shift_right)
        else:
            ox3 = _run_branch(x3, self.wf_left, self.shift_left)
            oh3 = _run_branch(h3, self.wf_right, self.shift_right)
        out_x = ox3.reshape(n, self.out_channels, hh, ww)
        out_h = oh3.reshape(nh, self.out_channels, hh2, ww2)
        return out_x, out_h


def _reference(cell, x_nchw, h_nchw):
    """Plain-JAX reference (unfolded BN) for correctness checking."""
    def branch(inp, w, gamma, beta, mean, var):
        y = jnp.maximum(inp.astype(jnp.float32), 0.0)
        y = jnp.einsum('nchw,oc->nohw', y, w)
        scale = gamma / jnp.sqrt(var + cell.eps)
        shift = beta - mean * scale
        return y * scale[None, :, None, None] + shift[None, :, None, None]
    rx = branch(x_nchw, cell.w_left, cell.gamma_left, cell.beta_left,
                cell.mean_left, cell.var_left)
    rh = branch(h_nchw, cell.w_right, cell.gamma_right, cell.beta_right,
                cell.mean_right, cell.var_right)
    return rx, rh


if __name__ == "__main__":
    key = jax.random.PRNGKey(0)
    kx, kh, kp, kx2, kh2, kx3, kh3 = jax.random.split(key, 7)

    # Primary shapes: batch=2, spatial=16x16, in_channels_x=4, in_channels_h=6,
    # out_channels=8.
    N, H, W = 2, 16, 16
    CIN_X, CIN_H, COUT = 4, 6, 8

    x = jax.random.normal(kx, (N, CIN_X, H, W), jnp.float32)
    h = jax.random.normal(kh, (N, CIN_H, H, W), jnp.float32)

    cell = ResizeCell1Pallas(CIN_X, CIN_H, COUT, kp)

    out_x, out_h = cell(x, h)
    out_x = jax.block_until_ready(out_x)
    out_h = jax.block_until_ready(out_h)

    ref_x, ref_h = _reference(cell, x, h)
    assert out_x.shape == (N, COUT, H, W) and out_h.shape == (N, COUT, H, W)
    assert jnp.allclose(out_x, ref_x, atol=1e-5, rtol=1e-5)
    assert jnp.allclose(out_h, ref_h, atol=1e-5, rtol=1e-5)

    # Extra check: batch-blocked path (nb > 1) with a partial final batch block.
    x2 = jax.random.normal(kx2, (9, CIN_X, 8, 8), jnp.float32)
    h2 = jax.random.normal(kh2, (9, CIN_H, 8, 8), jnp.float32)
    o2x, o2h = cell(x2, h2)
    r2x, r2h = _reference(cell, x2, h2)
    assert jnp.allclose(jax.block_until_ready(o2x), r2x, atol=1e-5, rtol=1e-5)
    assert jnp.allclose(jax.block_until_ready(o2h), r2h, atol=1e-5, rtol=1e-5)

    # Extra check: mismatched spatial shapes -> per-branch fallback kernel
    # (also exercises lane widths that are not multiples of 128, no padding).
    x3_ = jax.random.normal(kx3, (2, CIN_X, 12, 12), jnp.float32)
    h3_ = jax.random.normal(kh3, (2, CIN_H, 10, 10), jnp.float32)
    o3x, o3h = cell(x3_, h3_)
    r3x, r3h = _reference(cell, x3_, h3_)
    assert jnp.allclose(jax.block_until_ready(o3x), r3x, atol=1e-5, rtol=1e-5)
    assert jnp.allclose(jax.block_until_ready(o3h), r3h, atol=1e-5, rtol=1e-5)

    print("KERNEL_OK")
</pallas_src>

<mosaic_0001>
module attributes {stable_mosaic.version = 11 : i64} {
  func.func @_fused_kernel(%arg0: i32, %arg1: i32, %arg2: memref<1x4x256xf32, #tpu.memory_space<vmem>>, %arg3: memref<1x6x256xf32, #tpu.memory_space<vmem>>, %arg4: memref<8x4xf32, #tpu.memory_space<vmem>>, %arg5: memref<8x6xf32, #tpu.memory_space<vmem>>, %arg6: memref<8x1xf32, #tpu.memory_space<vmem>>, %arg7: memref<8x1xf32, #tpu.memory_space<vmem>>, %arg8: memref<1x8x256xf32, #tpu.memory_space<vmem>>, %arg9: memref<1x8x256xf32, #tpu.memory_space<vmem>>) attributes {dimension_semantics = [#tpu.dimension_semantics<parallel>, #tpu.dimension_semantics<parallel>], iteration_bounds = array<i64: 2, 1>, scalar_prefetch = 0 : i64, scratch_operands = 0 : i64, tpu.core_type = #tpu.core_type<tc>, window_params = [{transform_indices = @transform_0, window_bounds = array<i64: 1, 4, 256>}, {transform_indices = @transform_1, window_bounds = array<i64: 1, 6, 256>}, {pipeline_mode = #tpu.pipeline_mode<synchronous>, transform_indices = @transform_2, window_bounds = array<i64: 8, 4>}, {pipeline_mode = #tpu.pipeline_mode<synchronous>, transform_indices = @transform_3, window_bounds = array<i64: 8, 6>}, {pipeline_mode = #tpu.pipeline_mode<synchronous>, transform_indices = @transform_4, window_bounds = array<i64: 8, 1>}, {pipeline_mode = #tpu.pipeline_mode<synchronous>, transform_indices = @transform_5, window_bounds = array<i64: 8, 1>}, {transform_indices = @transform_6, window_bounds = array<i64: 1, 8, 256>}, {transform_indices = @transform_7, window_bounds = array<i64: 1, 8, 256>}]} {
    %c0 = arith.constant 0 : index
    %c0_0 = arith.constant 0 : index
    %0 = vector.load %arg4[%c0, %c0_0] : memref<8x4xf32, #tpu.memory_space<vmem>>, vector<8x4xf32>
    %c0_1 = arith.constant 0 : index
    %c0_2 = arith.constant 0 : index
    %1 = vector.load %arg5[%c0_1, %c0_2] : memref<8x6xf32, #tpu.memory_space<vmem>>, vector<8x6xf32>
    %c0_3 = arith.constant 0 : index
    %c0_4 = arith.constant 0 : index
    %2 = vector.load %arg6[%c0_3, %c0_4] : memref<8x1xf32, #tpu.memory_space<vmem>>, vector<8x1xf32>
    %c0_5 = arith.constant 0 : index
    %c0_6 = arith.constant 0 : index
    %3 = vector.load %arg7[%c0_5, %c0_6] : memref<8x1xf32, #tpu.memory_space<vmem>>, vector<8x1xf32>
    %c0_7 = arith.constant 0 : index
    %c0_8 = arith.constant 0 : index
    %c0_9 = arith.constant 0 : index
    %4 = vector.load %arg2[%c0_7, %c0_8, %c0_9] : memref<1x4x256xf32, #tpu.memory_space<vmem>>, vector<1x4x256xf32>
    %5 = vector.shape_cast %4 : vector<1x4x256xf32> to vector<4x256xf32>
    %cst = arith.constant 0.000000e+00 : f32
    %6 = vector.broadcast %cst : f32 to vector<4x256xf32>
    %7 = arith.maximumf %5, %6 : vector<4x256xf32>
    %cst_10 = arith.constant dense<0.000000e+00> : vector<8x256xf32>
    %8 = tpu.matmul %0, %7, %cst_10 {dimension_numbers = #tpu.dot_dimension_numbers<[1], [0], [0], [1], [0, 0, 1, 1], [], []>} : vector<8x4xf32>, vector<4x256xf32>, vector<8x256xf32> -> vector<8x256xf32>
    %9 = vector.broadcast %2 : vector<8x1xf32> to vector<8x256xf32>
    %10 = arith.addf %8, %9 : vector<8x256xf32>
    %c0_11 = arith.constant 0 : index
    %c0_12 = arith.constant 0 : index
    %c0_13 = arith.constant 0 : index
    %11 = vector.load %arg8[%c0_11, %c0_12, %c0_13] : memref<1x8x256xf32, #tpu.memory_space<vmem>>, vector<1x8x256xf32>
    %12 = vector.shape_cast %11 : vector<1x8x256xf32> to vector<8x256xf32>
    %13 = vector.shape_cast %10 : vector<8x256xf32> to vector<1x8x256xf32>
    tpu.vector_store %arg8[%c0_11, %c0_12, %c0_13], %13 {strides = array<i32>} : memref<1x8x256xf32, #tpu.memory_space<vmem>>, vector<1x8x256xf32>,
    %c0_14 = arith.constant 0 : index
    %c0_15 = arith.constant 0 : index
    %c0_16 = arith.constant 0 : index
    %14 = vector.load %arg3[%c0_14, %c0_15, %c0_16] : memref<1x6x256xf32, #tpu.memory_space<vmem>>, vector<1x6x256xf32>
    %15 = vector.shape_cast %14 : vector<1x6x256xf32> to vector<6x256xf32>
    %cst_17 = arith.constant 0.000000e+00 : f32
    %16 = vector.broadcast %cst_17 : f32 to vector<6x256xf32>
    %17 = arith.maximumf %15, %16 : vector<6x256xf32>
    %cst_18 = arith.constant dense<0.000000e+00> : vector<8x256xf32>
    %18 = tpu.matmul %1, %17, %cst_18 {dimension_numbers = #tpu.dot_dimension_numbers<[1], [0], [0], [1], [0, 0, 1, 1], [], []>} : vector<8x6xf32>, vector<6x256xf32>, vector<8x256xf32> -> vector<8x256xf32>
    %19 = vector.broadcast %3 : vector<8x1xf32> to vector<8x256xf32>
    %20 = arith.addf %18, %19 : vector<8x256xf32>
    %c0_19 = arith.constant 0 : index
    %c0_20 = arith.constant 0 : index
    %c0_21 = arith.constant 0 : index
    %21 = vector.load %arg9[%c0_19, %c0_20, %c0_21] : memref<1x8x256xf32, #tpu.memory_space<vmem>>, vector<1x8x256xf32>
    %22 = vector.shape_cast %21 : vector<1x8x256xf32> to vector<8x256xf32>
    %23 = vector.shape_cast %20 : vector<8x256xf32> to vector<1x8x256xf32>
    tpu.vector_store %arg9[%c0_19, %c0_20, %c0_21], %23 {strides = array<i32>} : memref<1x8x256xf32, #tpu.memory_space<vmem>>, vector<1x8x256xf32>,
    return
  }
  func.func @transform_0(%arg0: i32, %arg1: i32) -> (i32, i32, i32) {
    %c0_i32 = arith.constant 0 : i32
    %c0_i32_0 = arith.constant 0 : i32
    return %arg0, %c0_i32, %arg1 : i32, i32, i32
  }
  func.func @transform_1(%arg0: i32, %arg1: i32) -> (i32, i32, i32) {
    %c0_i32 = arith.constant 0 : i32
    %c0_i32_0 = arith.constant 0 : i32
    return %arg0, %c0_i32, %arg1 : i32, i32, i32
  }
  func.func @transform_2(%arg0: i32, %arg1: i32) -> (i32, i32) {
    %c0_i32 = arith.constant 0 : i32
    %c0_i32_0 = arith.constant 0 : i32
    %c0_i32_1 = arith.constant 0 : i32
    return %c0_i32, %c0_i32_0 : i32, i32
  }
  func.func @transform_3(%arg0: i32, %arg1: i32) -> (i32, i32) {
    %c0_i32 = arith.constant 0 : i32
    %c0_i32_0 = arith.constant 0 : i32
    %c0_i32_1 = arith.constant 0 : i32
    return %c0_i32, %c0_i32_0 : i32, i32
  }
  func.func @transform_4(%arg0: i32, %arg1: i32) -> (i32, i32) {
    %c0_i32 = arith.constant 0 : i32
    %c0_i32_0 = arith.constant 0 : i32
    %c0_i32_1 = arith.constant 0 : i32
    return %c0_i32, %c0_i32_0 : i32, i32
  }
  func.func @transform_5(%arg0: i32, %arg1: i32) -> (i32, i32) {
    %c0_i32 = arith.constant 0 : i32
    %c0_i32_0 = arith.constant 0 : i32
    %c0_i32_1 = arith.constant 0 : i32
    return %c0_i32, %c0_i32_0 : i32, i32
  }
  func.func @transform_6(%arg0: i32, %arg1: i32) -> (i32, i32, i32) {
    %c0_i32 = arith.constant 0 : i32
    %c0_i32_0 = arith.constant 0 : i32
    return %arg0, %c0_i32, %arg1 : i32, i32, i32
  }
  func.func @transform_7(%arg0: i32, %arg1: i32) -> (i32, i32, i32) {
    %c0_i32 = arith.constant 0 : i32
    %c0_i32_0 = arith.constant 0 : i32
    return %arg0, %c0_i32, %arg1 : i32, i32, i32
  }
}

</mosaic_0001>

<llo_original>
// kernel: tpu_custom_call.1
$region0: #{tpu_custom_call.1}
  #allocation0 [shape = 'u32[]', space=smem, size = 0x4, offset = 0x4, fixed_abs, tag = 'smem constant byte address 0x4 - core index']
  #allocation1 [shape = 'u32[144,128]{1,0:T(1,128)}', space=vmem, size = 0x12000, scoped, tag = 'internal scratch']
  %s0 = inlined_call_operand.vmem [shape: f32[2,4,256], index: 0, kind: input, shape index: {}]
  %s1 = inlined_call_operand.vmem [shape: f32[2,6,256], index: 1, kind: input, shape index: {}]
  %s2 = inlined_call_operand.vmem [shape: f32[8,4], index: 2, kind: input, shape index: {}]
  %s3 = inlined_call_operand.vmem [shape: f32[8,6], index: 3, kind: input, shape index: {}]
  %s4 = inlined_call_operand.vmem [shape: f32[8,1], index: 4, kind: input, shape index: {}]
  %s5 = inlined_call_operand.vmem [shape: f32[8,1], index: 5, kind: input, shape index: {}]
  %s6 = inlined_call_operand.hbm [shape: f32[2,8,256], index: 6, kind: output, shape index: {0}]
  %s7 = inlined_call_operand.hbm [shape: f32[2,8,256], index: 7, kind: output, shape index: {1}]
  %8 = xla_tuple %s6, %s7
  %s9 = sld [smem:[#allocation0]]
  $region65: #{tpu_custom_call.1} parent=0
    _
  %s11 = ssub.s32 1, %s9
  %s12 = scalar_select 0, %s11, %s9
  $region1: #{tpu_custom_call.1} parent=0
    #allocation2 [shape = 'u8[16384]{0}', space=vmem, size = 0x4000, scoped, tag = 'output window, operand 0']
    #allocation3 [shape = 's32[2]{0}', space=sflag, size = 0x8, scoped, tag = 'scoped memory for tpu_custom_call.1']
    #allocation4 [shape = 'u8[16384]{0}', space=vmem, size = 0x4000, scoped, tag = 'output window, operand 1']
    #allocation5 [shape = 's32[2]{0}', space=sflag, size = 0x8, scoped, tag = 'scoped memory for tpu_custom_call.1']
    %13 = vsyncpa [#allocation3], 0
    %s14 = scalar_lea.sflag [#allocation3], 1
    %15 = vsyncpa %s14, 0
    %16 = vsyncpa [#allocation5], 0
    %s17 = scalar_lea.sflag [#allocation5], 1
    %18 = vsyncpa %s17, 0
    loop: start=0, step=1, limit=4
    $region2: #{tpu_custom_call.1} parent=1 // loop_pre_header
      _
    $region3: #{tpu_custom_call.1} parent=1 // loop_header
      %s20 = sphi 0, %s24
      %p21 = scmp.ge.s32.totalorder %s20, 4
      %s27 = sphi 0, %s39
      %s28 = sphi 0, %s35
      %s29 = sphi 0, %s27
      %s30 = sphi 0, %s28
      %s31 = sphi 0, %s29
      %s32 = sphi 0, %s30
      %s44 = sphi 0, %s46
      %s47 = sphi 0, %s44
      %s48 = sphi 0, %s47
      %s64 = sphi 0, %s48
      %s72 = sphi 0, %s74
      %s75 = sphi 0, %s72
      %s76 = sphi 0, %s75
      %s92 = sphi 0, %s76
      %s96 = sphi 0, %s96
      %s98 = sphi 0, %s96
      %s99 = sphi 0, %s98
      %s113 = sphi 0, %s99
      %s117 = sphi 0, %s117
      %s119 = sphi 0, %s117
      %s120 = sphi 0, %s119
      %s134 = sphi 0, %s120
      %s138 = sphi 0, %s138
      %s140 = sphi 0, %s138
      %s141 = sphi 0, %s140
      %s155 = sphi 0, %s141
      %s159 = sphi 0, %s159
      %s161 = sphi 0, %s159
      %s162 = sphi 0, %s161
      %s176 = sphi 0, %s162
      %s184 = sphi 0, %s186
      %s187 = sphi 0, %s184
      %s188 = sphi 0, %s187
      %s204 = sphi 0, %s188
      %s212 = sphi 0, %s214
      %s215 = sphi 0, %s212
      %s216 = sphi 0, %s215
      %s232 = sphi 0, %s216
    $region4: #{tpu_custom_call.1} parent=1 // loop_header_branch
      %23 = sbr.rel (%p21) target = $region8
    $region5: #{tpu_custom_call.1} parent=1 // loop_body
      %s25 = ssub.s32 %s20, 1
      %s26 = ssub.s32 %s20, 2
      %s33 = sadd.s32 1, %s28
      %p34 = scmp.ge.s32.totalorder %s33, 1
      %s35 = scalar_select %p34, 0, %s33
      %s36 = sadd.s32 1, %s27
      %s37 = scalar_select %p34, %s36, %s27
      %p38 = scmp.ge.s32.totalorder %s37, 2
      %s39 = scalar_select %p38, 0, %s37
      %s40 = ssub.s32 %s27, %s39
      %s41 = ssub.s32 %s28, %s35
      %s42 = sor.u32 %s40, %s41
      %p43 = scmp.eq.s32.totalorder %s42, 0
      %s45 = sadd.s32 %s44, 1
      %s46 = scalar_select %p43, %s44, %s45
      %p49 = pneg %p43
      %p50 = scmp.eq.s32.totalorder %s20, 1
      %p51 = por %p49, %p50
      %p52 = scmp.ne.s32.totalorder %s44, %s47
      %p53 = scmp.eq.s32.totalorder %s20, 0
      %p54 = por %p52, %p53
      %p55 = scmp.ne.s32.totalorder %s44, %s47
      %p56 = scmp.eq.s32.totalorder %s25, 1
      %p57 = por %p55, %p56
      %p58 = scmp.ne.s32.totalorder %s47, %s48
      %p59 = scmp.eq.s32.totalorder %s25, 0
      %p60 = por %p58, %p59
      %p61 = scmp.ne.s32.totalorder %s47, %s48
      %p62 = scmp.eq.s32.totalorder %s26, 1
      %p63 = por %p61, %p62
      %p65 = scmp.ne.s32.totalorder %s48, %s64
      %p66 = scmp.eq.s32.totalorder %s26, 0
      %p67 = por %p65, %p66
      %s68 = ssub.s32 %s27, %s39
      %s69 = ssub.s32 %s28, %s35
      %s70 = sor.u32 %s68, %s69
      %p71 = scmp.eq.s32.totalorder %s70, 0
      %s73 = sadd.s32 %s72, 1
      %s74 = scalar_select %p71, %s72, %s73
      %p77 = pneg %p71
      %p78 = scmp.eq.s32.totalorder %s20, 1
      %p79 = por %p77, %p78
      %p80 = scmp.ne.s32.totalorder %s72, %s75
      %p81 = scmp.eq.s32.totalorder %s20, 0
      %p82 = por %p80, %p81
      %p83 = scmp.ne.s32.totalorder %s72, %s75
      %p84 = scmp.eq.s32.totalorder %s25, 1
      %p85 = por %p83, %p84
      %p86 = scmp.ne.s32.totalorder %s75, %s76
      %p87 = scmp.eq.s32.totalorder %s25, 0
      %p88 = por %p86, %p87
      %p89 = scmp.ne.s32.totalorder %s75, %s76
      %p90 = scmp.eq.s32.totalorder %s26, 1
      %p91 = por %p89, %p90
      %p93 = scmp.ne.s32.totalorder %s76, %s92
      %p94 = scmp.eq.s32.totalorder %s26, 0
      %p95 = por %p93, %p94
      %s97 = sadd.s32 %s96, 1
      %p100 = scmp.eq.s32.totalorder %s20, 1
      %p101 = scmp.ne.s32.totalorder %s96, %s98
      %p102 = scmp.eq.s32.totalorder %s20, 0
      %p103 = por %p101, %p102
      %p104 = scmp.ne.s32.totalorder %s96, %s98
      %p105 = scmp.eq.s32.totalorder %s25, 1
      %p106 = por %p104, %p105
      %p107 = scmp.ne.s32.totalorder %s98, %s99
      %p108 = scmp.eq.s32.totalorder %s25, 0
      %p109 = por %p107, %p108
      %p110 = scmp.ne.s32.totalorder %s98, %s99
      %p111 = scmp.eq.s32.totalorder %s26, 1
      %p112 = por %p110, %p111
      %p114 = scmp.ne.s32.totalorder %s99, %s113
      %p115 = scmp.eq.s32.totalorder %s26, 0
      %p116 = por %p114, %p115
      %s118 = sadd.s32 %s117, 1
      %p121 = scmp.eq.s32.totalorder %s20, 1
      %p122 = scmp.ne.s32.totalorder %s117, %s119
      %p123 = scmp.eq.s32.totalorder %s20, 0
      %p124 = por %p122, %p123
      %p125 = scmp.ne.s32.totalorder %s117, %s119
      %p126 = scmp.eq.s32.totalorder %s25, 1
      %p127 = por %p125, %p126
      %p128 = scmp.ne.s32.totalorder %s119, %s120
      %p129 = scmp.eq.s32.totalorder %s25, 0
      %p130 = por %p128, %p129
      %p131 = scmp.ne.s32.totalorder %s119, %s120
      %p132 = scmp.eq.s32.totalorder %s26, 1
      %p133 = por %p131, %p132
      %p135 = scmp.ne.s32.totalorder %s120, %s134
      %p136 = scmp.eq.s32.totalorder %s26, 0
      %p137 = por %p135, %p136
      %s139 = sadd.s32 %s138, 1
      %p142 = scmp.eq.s32.totalorder %s20, 1
      %p143 = scmp.ne.s32.totalorder %s138, %s140
      %p144 = scmp.eq.s32.totalorder %s20, 0
      %p145 = por %p143, %p144
      %p146 = scmp.ne.s32.totalorder %s138, %s140
      %p147 = scmp.eq.s32.totalorder %s25, 1
      %p148 = por %p146, %p147
      %p149 = scmp.ne.s32.totalorder %s140, %s141
      %p150 = scmp.eq.s32.totalorder %s25, 0
      %p151 = por %p149, %p150
      %p152 = scmp.ne.s32.totalorder %s140, %s141
      %p153 = scmp.eq.s32.totalorder %s26, 1
      %p154 = por %p152, %p153
      %p156 = scmp.ne.s32.totalorder %s141, %s155
      %p157 = scmp.eq.s32.totalorder %s26, 0
      %p158 = por %p156, %p157
      %s160 = sadd.s32 %s159, 1
      %p163 = scmp.eq.s32.totalorder %s20, 1
      %p164 = scmp.ne.s32.totalorder %s159, %s161
      %p165 = scmp.eq.s32.totalorder %s20, 0
      %p166 = por %p164, %p165
      %p167 = scmp.ne.s32.totalorder %s159, %s161
      %p168 = scmp.eq.s32.totalorder %s25, 1
      %p169 = por %p167, %p168
      %p170 = scmp.ne.s32.totalorder %s161, %s162
      %p171 = scmp.eq.s32.totalorder %s25, 0
      %p172 = por %p170, %p171
      %p173 = scmp.ne.s32.totalorder %s161, %s162
      %p174 = scmp.eq.s32.totalorder %s26, 1
      %p175 = por %p173, %p174
      %p177 = scmp.ne.s32.totalorder %s162, %s176
      %p178 = scmp.eq.s32.totalorder %s26, 0
      %p179 = por %p177, %p178
      %s180 = ssub.s32 %s27, %s39
      %s181 = ssub.s32 %s28, %s35
      %s182 = sor.u32 %s180, %s181
      %p183 = scmp.eq.s32.totalorder %s182, 0
      %s185 = sadd.s32 %s184, 1
      %s186 = scalar_select %p183, %s184, %s185
      %p189 = pneg %p183
      %p190 = scmp.eq.s32.totalorder %s20, 1
      %p191 = por %p189, %p190
      %p192 = scmp.ne.s32.totalorder %s184, %s187
      %p193 = scmp.eq.s32.totalorder %s20, 0
      %p194 = por %p192, %p193
      %p195 = scmp.ne.s32.totalorder %s184, %s187
      %p196 = scmp.eq.s32.totalorder %s25, 1
      %p197 = por %p195, %p196
      %p198 = scmp.ne.s32.totalorder %s187, %s188
      %p199 = scmp.eq.s32.totalorder %s25, 0
      %p200 = por %p198, %p199
      %p201 = scmp.ne.s32.totalorder %s187, %s188
      %p202 = scmp.eq.s32.totalorder %s26, 1
      %p203 = por %p201, %p202
      %p205 = scmp.ne.s32.totalorder %s188, %s204
      %p206 = scmp.eq.s32.totalorder %s26, 0
      %p207 = por %p205, %p206
      %s208 = ssub.s32 %s27, %s39
      %s209 = ssub.s32 %s28, %s35
      %s210 = sor.u32 %s208, %s209
      %p211 = scmp.eq.s32.totalorder %s210, 0
      %s213 = sadd.s32 %s212, 1
      %s214 = scalar_select %p211, %s212, %s213
      %p217 = pneg %p211
      %p218 = scmp.eq.s32.totalorder %s20, 1
      %p219 = por %p217, %p218
      %p220 = scmp.ne.s32.totalorder %s212, %s215
      %p221 = scmp.eq.s32.totalorder %s20, 0
      %p222 = por %p220, %p221
      %p223 = scmp.ne.s32.totalorder %s212, %s215
      %p224 = scmp.eq.s32.totalorder %s25, 1
      %p225 = por %p223, %p224
      %p226 = scmp.ne.s32.totalorder %s215, %s216
      %p227 = scmp.eq.s32.totalorder %s25, 0
      %p228 = por %p226, %p227
      %p229 = scmp.ne.s32.totalorder %s215, %s216
      %p230 = scmp.eq.s32.totalorder %s26, 1
      %p231 = por %p229, %p230
      %p233 = scmp.ne.s32.totalorder %s216, %s232
      %p234 = scmp.eq.s32.totalorder %s26, 0
      %p235 = por %p233, %p234
      %p236 = scmp.le.s32.totalorder 1, %s20
      %p237 = scmp.lt.s32.totalorder %s20, 3
      %p238 = pnand %p236, %p237
      %p239 = pneg %p238
      // Predicated region
      $region9: #{tpu_custom_call.1} parent=5 // pred_check
        _
      $region10: #{tpu_custom_call.1} parent=5 // pred_check_branch
        %241 = sbr.rel (%p238) target = $region12
      $region11: #{tpu_custom_call.1} parent=5 // pred_region
        %s242 = ssub.s32 %s20, 1
        // Predicated region
        $region13: #{tpu_custom_call.1} parent=11 // pred_check
          %p243 = pneg %p109
        $region14: #{tpu_custom_call.1} parent=11 // pred_check_branch
          %245 = sbr.rel (%p243) target = $region16
        $region15: #{tpu_custom_call.1} parent=11 // pred_region
          _
        $region16: #{tpu_custom_call.1} parent=11 // pred_fallthru
          _
        // Predicated region
        $region17: #{tpu_custom_call.1} parent=11 // pred_check
          %p246 = pneg %p130
        $region18: #{tpu_custom_call.1} parent=11 // pred_check_branch
          %248 = sbr.rel (%p246) target = $region20
        $region19: #{tpu_custom_call.1} parent=11 // pred_region
          _
        $region20: #{tpu_custom_call.1} parent=11 // pred_fallthru
          _
        // Predicated region
        $region21: #{tpu_custom_call.1} parent=11 // pred_check
          %p249 = pneg %p151
        $region22: #{tpu_custom_call.1} parent=11 // pred_check_branch
          %251 = sbr.rel (%p249) target = $region24
        $region23: #{tpu_custom_call.1} parent=11 // pred_region
          _
        $region24: #{tpu_custom_call.1} parent=11 // pred_fallthru
          _
        // Predicated region
        $region25: #{tpu_custom_call.1} parent=11 // pred_check
          %p252 = pneg %p172
        $region26: #{tpu_custom_call.1} parent=11 // pred_check_branch
          %254 = sbr.rel (%p252) target = $region28
        $region27: #{tpu_custom_call.1} parent=11 // pred_region
          _
        $region28: #{tpu_custom_call.1} parent=11 // pred_fallthru
          _
      $region12: #{tpu_custom_call.1} parent=5 // pred_fallthru
        _
      %p255 = scmp.lt.s32.totalorder %s20, 2
      // Predicated region
      $region29: #{tpu_custom_call.1} parent=5 // pred_check
        %p256 = pneg %p255
      $region30: #{tpu_custom_call.1} parent=5 // pred_check_branch
        %258 = sbr.rel (%p256) target = $region32
      $region31: #{tpu_custom_call.1} parent=5 // pred_region
        // Predicated region
        $region33: #{tpu_custom_call.1} parent=31 // pred_check
          %p259 = pneg %p54
        $region34: #{tpu_custom_call.1} parent=31 // pred_check_branch
          %261 = sbr.rel (%p259) target = $region36
        $region35: #{tpu_custom_call.1} parent=31 // pred_region
          %s262 = smul.u32 2, %s28
          %p263 = scmp.lt.s32.totalorder %s27, 1
          %s264 = scalar_select %p263, %s27, 1
          %p265 = scmp.lt.s32.totalorder %s262, 1
          %s266 = scalar_select %p265, %s262, 1
          %s267 = smul.addr %s264, 2
          %s268 = sadd.s32 %s266, %s267
          %s269 = smul.addr %s268, 4
          %s270 = scalar_lea.vmem %s0, %s269
          %s271 = smul.u32 2, %s28
        $region36: #{tpu_custom_call.1} parent=31 // pred_fallthru
          _
        // Predicated region
        $region37: #{tpu_custom_call.1} parent=31 // pred_check
          %p272 = pneg %p82
        $region38: #{tpu_custom_call.1} parent=31 // pred_check_branch
          %274 = sbr.rel (%p272) target = $region40
        $region39: #{tpu_custom_call.1} parent=31 // pred_region
          %s275 = smul.u32 2, %s28
          %p276 = scmp.lt.s32.totalorder %s27, 1
          %s277 = scalar_select %p276, %s27, 1
          %p278 = scmp.lt.s32.totalorder %s275, 1
          %s279 = scalar_select %p278, %s275, 1
          %s280 = smul.addr %s277, 2
          %s281 = sadd.s32 %s279, %s280
          %s282 = smul.addr %s281, 8
          %s283 = scalar_lea.vmem %s1, %s282
          %s284 = smul.u32 2, %s28
        $region40: #{tpu_custom_call.1} parent=31 // pred_fallthru
          _
      $region32: #{tpu_custom_call.1} parent=5 // pred_fallthru
        _
      %p285 = scmp.le.s32.totalorder 1, %s20
      %p286 = scmp.lt.s32.totalorder %s20, 3
      %p287 = pnand %p285, %p286
      %p288 = pneg %p287
      // Predicated region
      $region41: #{tpu_custom_call.1} parent=5 // pred_check
        _
      $region42: #{tpu_custom_call.1} parent=5 // pred_check_branch
        %290 = sbr.rel (%p287) target = $region44
      $region43: #{tpu_custom_call.1} parent=5 // pred_region
        %s291 = ssub.s32 %s20, 1
        %s292 = smul.u32 2, %s30
        %p293 = scmp.lt.s32.totalorder %s29, 1
        %s294 = scalar_select %p293, %s29, 1
        %p295 = scmp.lt.s32.totalorder %s292, 1
        %s296 = scalar_select %p295, %s292, 1
        %s297 = smul.addr %s294, 2
        %s298 = sadd.s32 %s296, %s297
        %s299 = smul.addr %s298, 4
        %s300 = scalar_lea.vmem %s0, %s299
        %p301 = pneg %p60
        %p302 = pneg %p57
        %s303 = smul.u32 2, %s30
        %p304 = scmp.lt.s32.totalorder %s29, 1
        %s305 = scalar_select %p304, %s29, 1
        %p306 = scmp.lt.s32.totalorder %s303, 1
        %s307 = scalar_select %p306, %s303, 1
        %s308 = smul.addr %s305, 2
        %s309 = sadd.s32 %s307, %s308
        %s310 = smul.addr %s309, 8
        %s311 = scalar_lea.vmem %s1, %s310
        %p312 = pneg %p88
        %p313 = pneg %p85
        %p314 = pneg %p109
        %p315 = pneg %p106
        %p316 = pneg %p130
        %p317 = pneg %p127
        %p318 = pneg %p151
        %p319 = pneg %p148
        %p320 = pneg %p172
        %p321 = pneg %p169
        %p322 = pneg %p200
        %p323 = pneg %p197
        %s324 = sand.u32 %s187, 1
        %s325 = scalar_lea.sflag [#allocation3], %s324
        %s326 = sand.u32 %s187, 1
        %s327 = smul.addr %s326, 16
        %s328 = scalar_lea.vmem [#allocation2], %s327
        %p329 = pneg %p228
        %p330 = pneg %p225
        %s331 = sand.u32 %s215, 1
        %s332 = scalar_lea.sflag [#allocation5], %s331
        %s333 = sand.u32 %s215, 1
        %s334 = smul.addr %s333, 16
        %s335 = scalar_lea.vmem [#allocation4], %s334
        %s336 = smul.u32 2, %s30
        %p337 = scmp.lt.s32.totalorder %s29, 1
        %s338 = scalar_select %p337, %s29, 1
        %p339 = scmp.lt.s32.totalorder %s336, 1
        %s340 = scalar_select %p339, %s336, 1
        %s341 = smul.addr %s338, 2
        %s342 = sadd.s32 %s340, %s341
        %s343 = smul.addr %s342, 4
        %s344 = scalar_lea.vmem %s0, %s343
        %s345 = smul.u32 2, %s30
        %s346 = smul.u32 2, %s30
        %p347 = scmp.lt.s32.totalorder %s29, 1
        %s348 = scalar_select %p347, %s29, 1
        %p349 = scmp.lt.s32.totalorder %s346, 1
        %s350 = scalar_select %p349, %s346, 1
        %s351 = smul.addr %s348, 2
        %s352 = sadd.s32 %s350, %s351
        %s353 = smul.addr %s352, 8
        %s354 = scalar_lea.vmem %s1, %s353
        %s355 = smul.u32 2, %s30
        %s356 = smul.u32 2, %s30
        %s357 = smul.u32 2, %s30
        %v358 = vld [vmem:[%s2] sm:$0xff]
        %v359 = vld [vmem:[%s3] sm:$0xff]
        %v360 = vld [vmem:[%s4] sm:$0xff]
        %v361 = vld [vmem:[%s5] sm:$0xff]
        %v362 = vld [vmem:[%s344] sm:$0xff]
        %v363 = vmax.f32 %v362, 0.0
        %365 = vset.pattern.permute.xlu0 0
        %366 = vperm.xlu0 %365, %v360
        %v367 = vpop.permute.xlu0 %366
        %v370 = vcombine.high %v363, %v363
        %vm371 = vcmask 31744
        %v373 = vsel %vm371, %v358, 0
        %vm375 = vcmask 1043456
        %v376 = vsel %vm375, %v363, 0
        %v378 = vsel %vm375, %v370, 0
        %380 = vmatprep.subr.mxu0 0.0
        %381 = vmatpush1.msra.mxu0 0.0
        %382 = vmatprep.subr.mxu0 0.0
        %383 = vmatpush1.msra.mxu0 0.0
        %384 = vmatprep.subr.mxu0 0.0
        %385 = vmatpush1.msra.mxu0 0.0
        %386 = vmatprep.subr.mxu0 0.0
        %387 = vmatpush1.msra.mxu0 0.0
        %388 = vmatprep.subr.mxu0 0.0
        %389 = vmatpush1.msra.mxu0 0.0
        %390 = vmatprep.subr.mxu0 0.0
        %391 = vmatpush1.msra.mxu0 0.0
        %392 = vmatprep.subr.mxu0 0.0
        %393 = vmatpush1.msra.mxu0 0.0
        %394 = vmatprep.subr.mxu0 0.0
        %395 = vmatpush1.msra.mxu0 0.0
        %396 = vmatprep.subr.mxu0 0.0
        %397 = vmatpush1.msra.mxu0 0.0
        %398 = vmatprep.subr.mxu0 0.0
        %399 = vmatpush1.msra.mxu0 0.0
        %400 = vmatprep.subr.mxu0 0.0
        %401 = vmatpush1.msra.mxu0 0.0
        %402 = vmatprep.subr.mxu0 0.0
        %403 = vmatpush1.msra.mxu0 0.0
        %404 = vmatprep.subr.mxu0 0.0
        %405 = vmatpush1.msra.mxu0 0.0
        %406 = vmatprep.subr.mxu0 0.0
        %407 = vmatpush1.msra.mxu0 0.0
        %408 = vmatprep.subr.mxu0 0.0
        %409 = vmatpush1.msra.mxu0 0.0
        %410 = vmatprep.subr.mxu0 %v378
        %411 = vmatpush1.msra.mxu0 %v376
        %412 = vmatprep.subr.mxu0 0.0
        %413 = vmatpush2.msra.mxu0 0.0
        %414 = vmatprep.subr.mxu0 0.0
        %415 = vmatpush2.msra.mxu0 0.0
        %416 = vmatprep.subr.mxu0 0.0
        %417 = vmatpush2.msra.mxu0 0.0
        %418 = vmatprep.subr.mxu0 0.0
        %419 = vmatpush2.msra.mxu0 0.0
        %420 = vmatprep.subr.mxu0 0.0
        %421 = vmatpush2.msra.mxu0 0.0
        %422 = vmatprep.subr.mxu0 0.0
        %423 = vmatpush2.msra.mxu0 0.0
        %424 = vmatprep.subr.mxu0 0.0
        %425 = vmatpush2.msra.mxu0 0.0
        %426 = vmatprep.subr.mxu0 0.0
        %427 = vmatpush2.msra.mxu0 0.0
        %428 = vmatprep.subr.mxu0 0.0
        %429 = vmatpush2.msra.mxu0 0.0
        %430 = vmatprep.subr.mxu0 0.0
        %431 = vmatpush2.msra.mxu0 0.0
        %432 = vmatprep.subr.mxu0 0.0
        %433 = vmatpush2.msra.mxu0 0.0
        %434 = vmatprep.subr.mxu0 0.0
        %435 = vmatpush2.msra.mxu0 0.0
        %436 = vmatprep.subr.mxu0 0.0
        %437 = vmatpush2.msra.mxu0 0.0
        %438 = vmatprep.subr.mxu0 0.0
        %439 = vmatpush2.msra.mxu0 0.0
        %440 = vmatprep.subr.mxu0 0.0
        %441 = vmatpush2.msra.mxu0 0.0
        %442 = vmatprep.subr.mxu0 0.0
        %443 = vmatpush2.msra.mxu0 0.0
        %444 = vmatprep.mubr.f32.mxu0 0.0
        %445 = vmatmul.mubr.f32.gmra.mxu0 %v373
        %v446 = vpop.f32.mrf.mxu0
        %v447 = vadd.f32 %v367, %v446
        %v448 = vpop.f32.mrf.mxu0
        %v449 = vadd.f32 %v367, %v448
        %450 = vdwg.mxu0
        %451 = vst [vmem:[%s328] sm:$0xff] %v447
        %452 = vst [vmem:[%s328 + $0x8] sm:$0xff] %v449
        %v453 = vld [vmem:[%s354] sm:$0x3f]
        %v454 = vld [vmem:[%s354 + $0x8] sm:$0x3f]
        %v455 = vmax.f32 %v453, 0.0
        %v456 = vmax.f32 %v454, 0.0
        %458 = vset.pattern.permute.xlu0 0
        %459 = vperm.xlu0 %458, %v361
        %v460 = vpop.permute.xlu0 %459
        %vm462 = vcmask 48128
        %v464 = vsel %vm462, %v359, 0
        %vm466 = vcmask 1045504
        %v468 = vsel %vm466, %v455, 0
        %v471 = vsel %vm466, %v456, 0
        %473 = vmatprep.subr.mxu0 0.0
        %474 = vmatpush1.msra.mxu0 0.0
        %475 = vmatprep.subr.mxu0 0.0
        %476 = vmatpush1.msra.mxu0 0.0
        %477 = vmatprep.subr.mxu0 0.0
        %478 = vmatpush1.msra.mxu0 0.0
        %479 = vmatprep.subr.mxu0 0.0
        %480 = vmatpush1.msra.mxu0 0.0
        %481 = vmatprep.subr.mxu0 0.0
        %482 = vmatpush1.msra.mxu0 0.0
        %483 = vmatprep.subr.mxu0 0.0
        %484 = vmatpush1.msra.mxu0 0.0
        %485 = vmatprep.subr.mxu0 0.0
        %486 = vmatpush1.msra.mxu0 0.0
        %487 = vmatprep.subr.mxu0 0.0
        %488 = vmatpush1.msra.mxu0 0.0
        %489 = vmatprep.subr.mxu0 0.0
        %490 = vmatpush1.msra.mxu0 0.0
        %491 = vmatprep.subr.mxu0 0.0
        %492 = vmatpush1.msra.mxu0 0.0
        %493 = vmatprep.subr.mxu0 0.0
        %494 = vmatpush1.msra.mxu0 0.0
        %495 = vmatprep.subr.mxu0 0.0
        %496 = vmatpush1.msra.mxu0 0.0
        %497 = vmatprep.subr.mxu0 0.0
        %498 = vmatpush1.msra.mxu0 0.0
        %499 = vmatprep.subr.mxu0 0.0
        %500 = vmatpush1.msra.mxu0 0.0
        %501 = vmatprep.subr.mxu0 0.0
        %502 = vmatpush1.msra.mxu0 0.0
        %503 = vmatprep.subr.mxu0 %v471
        %504 = vmatpush1.msra.mxu0 %v468
        %505 = vmatprep.subr.mxu0 0.0
        %506 = vmatpush2.msra.mxu0 0.0
        %507 = vmatprep.subr.mxu0 0.0
        %508 = vmatpush2.msra.mxu0 0.0
        %509 = vmatprep.subr.mxu0 0.0
        %510 = vmatpush2.msra.mxu0 0.0
        %511 = vmatprep.subr.mxu0 0.0
        %512 = vmatpush2.msra.mxu0 0.0
        %513 = vmatprep.subr.mxu0 0.0
        %514 = vmatpush2.msra.mxu0 0.0
        %515 = vmatprep.subr.mxu0 0.0
        %516 = vmatpush2.msra.mxu0 0.0
        %517 = vmatprep.subr.mxu0 0.0
        %518 = vmatpush2.msra.mxu0 0.0
        %519 = vmatprep.subr.mxu0 0.0
        %520 = vmatpush2.msra.mxu0 0.0
        %521 = vmatprep.subr.mxu0 0.0
        %522 = vmatpush2.msra.mxu0 0.0
        %523 = vmatprep.subr.mxu0 0.0
        %524 = vmatpush2.msra.mxu0 0.0
        %525 = vmatprep.subr.mxu0 0.0
        %526 = vmatpush2.msra.mxu0 0.0
        %527 = vmatprep.subr.mxu0 0.0
        %528 = vmatpush2.msra.mxu0 0.0
        %529 = vmatprep.subr.mxu0 0.0
        %530 = vmatpush2.msra.mxu0 0.0
        %531 = vmatprep.subr.mxu0 0.0
        %532 = vmatpush2.msra.mxu0 0.0
        %533 = vmatprep.subr.mxu0 0.0
        %534 = vmatpush2.msra.mxu0 0.0
        %535 = vmatprep.subr.mxu0 0.0
        %536 = vmatpush2.msra.mxu0 0.0
        %537 = vmatprep.mubr.f32.mxu0 0.0
        %538 = vmatmul.mubr.f32.gmra.mxu0 %v464
        %v539 = vpop.f32.mrf.mxu0
        %v540 = vadd.f32 %v460, %v539
        %v541 = vpop.f32.mrf.mxu0
        %v542 = vadd.f32 %v460, %v541
        %543 = vdwg.mxu0
        %544 = vst [vmem:[%s335] sm:$0xff] %v540
        %545 = vst [vmem:[%s335 + $0x8] sm:$0xff] %v542
        %s546 = sand.u32 %s187, 1
        %s547 = scalar_lea.sflag [#allocation3], %s546
        %s548 = sand.u32 %s187, 1
        %s549 = smul.addr %s548, 16
        %s550 = scalar_lea.vmem [#allocation2], %s549
        %s551 = sand.u32 %s215, 1
        %s552 = scalar_lea.sflag [#allocation5], %s551
        %s553 = sand.u32 %s215, 1
        %s554 = smul.addr %s553, 16
        %s555 = scalar_lea.vmem [#allocation4], %s554
        // Predicated region
        $region45: #{tpu_custom_call.1} parent=43 // pred_check
          %p556 = pneg %p197
        $region46: #{tpu_custom_call.1} parent=43 // pred_check_branch
          %558 = sbr.rel (%p556) target = $region48
        $region47: #{tpu_custom_call.1} parent=43 // pred_region
          %s559 = smul.u32 2, %s30
          %s561 = ssub.s32 256, 256
          %562 = vsyncadd %s547, %s561
          %s563 = smul.addr %s29, 2
          %s564 = sadd.s32 %s559, %s563
          %s565 = smul.addr %s564, 128
          %s566 = scalar_lea.hbm %s6, %s565
          %s568 = sshll.u32 %s550, 4
          %s569 = int_to_ptr.vmem [resolvable:$true] %s568
          %571 = dma.vmem_to_hbm [thread:$0]  %s569, 256, %s566, %s547
        $region48: #{tpu_custom_call.1} parent=43 // pred_fallthru
          _
        // Predicated region
        $region49: #{tpu_custom_call.1} parent=43 // pred_check
          %p572 = pneg %p225
        $region50: #{tpu_custom_call.1} parent=43 // pred_check_branch
          %574 = sbr.rel (%p572) target = $region52
        $region51: #{tpu_custom_call.1} parent=43 // pred_region
          %s575 = smul.u32 2, %s30
          %s577 = ssub.s32 256, 256
          %578 = vsyncadd %s552, %s577
          %s579 = smul.addr %s29, 2
          %s580 = sadd.s32 %s575, %s579
          %s581 = smul.addr %s580, 128
          %s582 = scalar_lea.hbm %s7, %s581
          %s584 = sshll.u32 %s555, 4
          %s585 = int_to_ptr.vmem [resolvable:$true] %s584
          %587 = dma.vmem_to_hbm [thread:$0]  %s585, 256, %s582, %s552
        $region52: #{tpu_custom_call.1} parent=43 // pred_fallthru
          _
      $region44: #{tpu_custom_call.1} parent=5 // pred_fallthru
        _
      %p588 = scmp.le.s32.totalorder 2, %s20
      // Predicated region
      $region53: #{tpu_custom_call.1} parent=5 // pred_check
        %p589 = pneg %p588
      $region54: #{tpu_custom_call.1} parent=5 // pred_check_branch
        %591 = sbr.rel (%p589) target = $region56
      $region55: #{tpu_custom_call.1} parent=5 // pred_region
        %s592 = ssub.s32 %s20, 2
        // Predicated region
        $region57: #{tpu_custom_call.1} parent=55 // pred_check
          %p593 = pneg %p203
        $region58: #{tpu_custom_call.1} parent=55 // pred_check_branch
          %595 = sbr.rel (%p593) target = $region60
        $region59: #{tpu_custom_call.1} parent=55 // pred_region
          %s596 = sand.u32 %s188, 1
          %s597 = scalar_lea.sflag [#allocation3], %s596
          %s598 = sand.u32 %s188, 1
          %s599 = smul.addr %s598, 16
          %s600 = scalar_lea.vmem [#allocation2], %s599
          %601 = dma.done %s597, 256
        $region60: #{tpu_custom_call.1} parent=55 // pred_fallthru
          _
        // Predicated region
        $region61: #{tpu_custom_call.1} parent=55 // pred_check
          %p602 = pneg %p231
        $region62: #{tpu_custom_call.1} parent=55 // pred_check_branch
          %604 = sbr.rel (%p602) target = $region64
        $region63: #{tpu_custom_call.1} parent=55 // pred_region
          %s605 = sand.u32 %s216, 1
          %s606 = scalar_lea.sflag [#allocation5], %s605
          %s607 = sand.u32 %s216, 1
          %s608 = smul.addr %s607, 16
          %s609 = scalar_lea.vmem [#allocation4], %s608
          %610 = dma.done %s606, 256
        $region64: #{tpu_custom_call.1} parent=55 // pred_fallthru
          _
      $region56: #{tpu_custom_call.1} parent=5 // pred_fallthru
        _
    $region6: #{tpu_custom_call.1} parent=1 // loop_footer
      %s24 = sadd.s32 1, %s20
    $region7: #{tpu_custom_call.1} parent=1 // loop_footer_branch
      %19 = sbr.rel target = $region3
    $region8: #{tpu_custom_call.1} parent=1 // loop_exit
      _
    %611 = vsyncpa [#allocation3], 1
    %s612 = scalar_lea.sflag [#allocation3], 1
    %613 = vsyncpa %s612, 1
    %614 = vsyncpa [#allocation5], 1
    %s615 = scalar_lea.sflag [#allocation5], 1
    %616 = vsyncpa %s615, 1

</llo_original>
